<compile_context>
chip_gen: v5e
topology: v5e:2x2
jax: 0.10.0
libtpu: 0.0.40
codegen_flags: <defaults>
</compile_context>

<pallas_src>
import functools

import jax
import jax.numpy as jnp
from jax.experimental import pallas as pl
from jax.experimental.pallas import tpu as pltpu

_LANES = 128
_SUBLANES = 8
# Combined (lane-padded) VMEM bytes per grid step for both input tiles.
# x2 pipeline buffers + f32 temporaries stays well under scoped-VMEM limits.
_TILE_BYTES = 2 * 1024 * 1024


def _round_up(x, m):
    return (x + m - 1) // m * m


def _pick_row_tile(rows, kp, kn):
    # Lane-padded f32 VMEM bytes per row for both inputs (conservative).
    bytes_per_row = (_round_up(kp, _LANES) + _round_up(kn, _LANES)) * 4
    tm = (_TILE_BYTES // bytes_per_row) // _SUBLANES * _SUBLANES
    tm = max(_SUBLANES, min(tm, _round_up(rows, _SUBLANES)))
    return tm


def _pad_rows(x, target_rows):
    pad = target_rows - x.shape[0]
    if pad <= 0:
        return x
    return jnp.concatenate([x, jnp.zeros((pad, x.shape[1]), x.dtype)], axis=0)


def _hinge_sum_kernel(pos_ref, neg_ref, out_ref, *, margin, bcast_pos, bcast_neg,
                      valid_rows, needs_mask):
    """Accumulate sum(max(0, neg - pos + margin)) over the row-tile grid axis."""
    t = pl.program_id(1)

    @pl.when(t == 0)
    def _init():
        out_ref[...] = jnp.zeros_like(out_ref)

    pos = pos_ref[...].astype(jnp.float32)
    neg = neg_ref[...].astype(jnp.float32)
    # In-kernel lane broadcast replaces the HBM-side repeat_interleave.
    if bcast_pos:
        pos = jnp.broadcast_to(pos, neg.shape)
    if bcast_neg:
        neg = jnp.broadcast_to(neg, pos.shape)

    hinge = jnp.maximum(neg - pos + jnp.float32(margin), jnp.float32(0.0))

    if needs_mask:
        tm = hinge.shape[0]
        row0 = (pl.program_id(0) * pl.num_programs(1) + t) * tm
        row_ids = row0 + jax.lax.broadcasted_iota(jnp.int32, hinge.shape, 0)
        hinge = jnp.where(row_ids < valid_rows, hinge, jnp.float32(0.0))

    # Scalar partial sum broadcast over the resident (1, 8, 128) output block.
    out_ref[...] += jnp.sum(hinge)


def _hinge_sum(pos2d, neg2d, margin, bcast_pos, bcast_neg):
    """pos2d: [rows, Kp], neg2d: [rows, Kn] (one of Kp/Kn may be 1 -> broadcast).

    Returns the f32 scalar sum of the hinge over all true rows.
    """
    rows = pos2d.shape[0]
    kp, kn = pos2d.shape[1], neg2d.shape[1]

    tm = _pick_row_tile(rows, kp, kn)
    if rows < tm:
        # Tiny inputs only: pad up to one full tile (cheap); mask handles it.
        pos2d = _pad_rows(pos2d, tm)
        neg2d = _pad_rows(neg2d, tm)

    tiles = pl.cdiv(rows, tm)
    # Leading 'parallel' axis so both TensorCores on v7x split the rows.
    splits = 2 if (tiles >= 2 and tiles % 2 == 0) else 1
    tiles_per_split = tiles // splits
    needs_mask = (tiles * tm != rows)

    kernel = functools.partial(
        _hinge_sum_kernel,
        margin=float(margin),
        bcast_pos=bcast_pos,
        bcast_neg=bcast_neg,
        valid_rows=rows,
        needs_mask=needs_mask,
    )

    def in_map(c, t, _tps=tiles_per_split):
        return (c * _tps + t, 0)

    partials = pl.pallas_call(
        kernel,
        out_shape=jax.ShapeDtypeStruct((splits, _SUBLANES, _LANES), jnp.float32),
        grid_spec=pltpu.PrefetchScalarGridSpec(
            num_scalar_prefetch=0,
            grid=(splits, tiles_per_split),
            in_specs=[
                pl.BlockSpec((tm, kp), in_map),
                pl.BlockSpec((tm, kn), in_map),
            ],
            out_specs=pl.BlockSpec((1, _SUBLANES, _LANES), lambda c, t: (c, 0, 0)),
        ),
        compiler_params=pltpu.CompilerParams(
            dimension_semantics=("parallel", "arbitrary"),
            vmem_limit_bytes=32 * 1024 * 1024,
        ),
    )(pos2d, neg2d)

    # Every element of a split's (8, 128) block holds that split's partial sum.
    return jnp.sum(partials[:, 0, 0])


def scoring_loss(pos_scores, neg_scores, margin=0.1):
    """JAX/Pallas equivalent of ScoringLoss.forward."""
    pos = jnp.asarray(pos_scores)
    neg = jnp.asarray(neg_scores)
    if pos.ndim != 2 or neg.ndim != 2 or pos.shape[0] != neg.shape[0]:
        raise ValueError("pos_scores / neg_scores must be 2-D with equal batch dims")

    b = pos.shape[0]
    p, n = pos.shape[1], neg.shape[1]
    k = max(p, n)
    count = b * k  # true number of hinge terms (mean denominator)

    if p == n:
        if count % _LANES == 0:
            # Lane-dense layout: free row-major reshape, no HBM copy.
            pos = pos.reshape(-1, _LANES)
            neg = neg.reshape(-1, _LANES)
        total = _hinge_sum(pos, neg, margin, bcast_pos=False, bcast_neg=False)
    elif p == 1 or n == 1:
        # Keep the narrow tensor narrow in HBM; broadcast inside the kernel.
        total = _hinge_sum(pos, neg, margin, bcast_pos=(p == 1), bcast_neg=(n == 1))
    else:
        # TODO(synk): uneven widths with both > 1 (rare) fall back to an HBM
        # repeat_interleave copy before reusing the dense elementwise path.
        if p < n:
            if n % p != 0:
                raise ValueError("neg width must be a multiple of pos width")
            pos = jnp.repeat(pos, n // p, axis=1)
        else:
            if p % n != 0:
                raise ValueError("pos width must be a multiple of neg width")
            neg = jnp.repeat(neg, p // n, axis=1)
        if count % _LANES == 0:
            pos = pos.reshape(-1, _LANES)
            neg = neg.reshape(-1, _LANES)
        total = _hinge_sum(pos, neg, margin, bcast_pos=False, bcast_neg=False)

    return total / jnp.float32(count)


def _reference_loss(pos_scores, neg_scores, margin=0.1):
    p, n = pos_scores.shape[1], neg_scores.shape[1]
    if p < n:
        pos_scores = jnp.repeat(pos_scores, n // p, axis=1)
    elif p > n:
        neg_scores = jnp.repeat(neg_scores, p // n, axis=1)
    return jnp.mean(jnp.maximum(neg_scores - pos_scores + margin, 0.0))


if __name__ == "__main__":
    key = jax.random.PRNGKey(0)

    cases = [
        ((2, 1), (2, 8)),        # one positive, eight negatives (broadcast pos)
        ((2, 8), (2, 1)),        # broadcast neg
        ((4, 8), (4, 8)),        # equal widths, small, not lane-flattenable
        ((16, 8), (16, 8)),      # equal widths, flattens to lane-dense (1, 128)
        ((4000, 1), (4000, 8)),  # multi-tile + dual-core split + row masking
    ]

    for i, (ps, ns) in enumerate(cases):
        kp, kn = jax.random.split(jax.random.fold_in(key, i))
        pos = jax.random.normal(kp, ps, dtype=jnp.float32)
        neg = jax.random.normal(kn, ns, dtype=jnp.float32)

        out = jax.block_until_ready(scoring_loss(pos, neg, margin=0.1))
        ref = _reference_loss(pos, neg, margin=0.1)
        assert jnp.allclose(out, ref, atol=1e-5, rtol=1e-5), (i, out, ref)

    print("KERNEL_OK")
</pallas_src>

<mosaic_0001>
module attributes {stable_mosaic.version = 11 : i64} {
  func.func @_hinge_sum_kernel(%arg0: i32, %arg1: i32, %arg2: memref<8x1xf32, #tpu.memory_space<vmem>>, %arg3: memref<8x8xf32, #tpu.memory_space<vmem>>, %arg4: memref<1x8x128xf32, #tpu.memory_space<vmem>>) attributes {dimension_semantics = [#tpu.dimension_semantics<parallel>, #tpu.dimension_semantics<arbitrary>], iteration_bounds = array<i64: 1, 1>, scalar_prefetch = 0 : i64, scratch_operands = 0 : i64, tpu.core_type = #tpu.core_type<tc>, window_params = [{transform_indices = @transform_0, window_bounds = array<i64: 8, 1>}, {transform_indices = @transform_1, window_bounds = array<i64: 8, 8>}, {transform_indices = @transform_2, window_bounds = array<i64: 1, 8, 128>}]} {
    %c0_i32 = arith.constant 0 : i32
    %0 = arith.cmpi eq, %arg1, %c0_i32 : i32
    %1 = arith.extui %0 : i1 to i32
    %c0_i32_0 = arith.constant 0 : i32
    %2 = arith.cmpi ne, %1, %c0_i32_0 : i32
    scf.if %2 {
      %cst_13 = arith.constant 0.000000e+00 : f32
      %30 = vector.broadcast %cst_13 : f32 to vector<1x8x128xf32>
      %c0_14 = arith.constant 0 : index
      %c0_15 = arith.constant 0 : index
      %c0_16 = arith.constant 0 : index
      %31 = vector.load %arg4[%c0_14, %c0_15, %c0_16] : memref<1x8x128xf32, #tpu.memory_space<vmem>>, vector<1x8x128xf32>
      tpu.vector_store %arg4[%c0_14, %c0_15, %c0_16], %30 {strides = array<i32>} : memref<1x8x128xf32, #tpu.memory_space<vmem>>, vector<1x8x128xf32>,
    } else {
    }
    %c0 = arith.constant 0 : index
    %c0_1 = arith.constant 0 : index
    %3 = vector.load %arg2[%c0, %c0_1] : memref<8x1xf32, #tpu.memory_space<vmem>>, vector<8x1xf32>
    %c0_2 = arith.constant 0 : index
    %c0_3 = arith.constant 0 : index
    %4 = vector.load %arg3[%c0_2, %c0_3] : memref<8x8xf32, #tpu.memory_space<vmem>>, vector<8x8xf32>
    %5 = vector.shape_cast %3 : vector<8x1xf32> to vector<8x1xf32>
    %6 = vector.broadcast %5 : vector<8x1xf32> to vector<8x8xf32>
    %7 = arith.subf %4, %6 : vector<8x8xf32>
    %cst = arith.constant 1.000000e-01 : f32
    %8 = vector.broadcast %cst : f32 to vector<8x8xf32>
    %9 = arith.addf %7, %8 : vector<8x8xf32>
    %cst_4 = arith.constant 0.000000e+00 : f32
    %10 = vector.broadcast %cst_4 : f32 to vector<8x8xf32>
    %11 = arith.maximumf %9, %10 : vector<8x8xf32>
    %c1_i32 = arith.constant 1 : i32
    %12 = arith.muli %arg0, %c1_i32 : i32
    %13 = arith.addi %12, %arg1 : i32
    %c8_i32 = arith.constant 8 : i32
    %14 = arith.muli %13, %c8_i32 : i32
    %15 = tpu.iota {dimensions = array<i32: 0>} : vector<8x8xi32>
    %16 = vector.broadcast %14 : i32 to vector<8x8xi32>
    %17 = arith.addi %16, %15 : vector<8x8xi32>
    %c2_i32 = arith.constant 2 : i32
    %18 = vector.broadcast %c2_i32 : i32 to vector<8x8xi32>
    %19 = arith.cmpi slt, %17, %18 : vector<8x8xi32>
    %cst_5 = arith.constant 0.000000e+00 : f32
    %20 = vector.broadcast %cst_5 : f32 to vector<8x8xf32>
    %21 = arith.select %19, %11, %20 : vector<8x8xi1>, vector<8x8xf32>
    %c0_6 = arith.constant 0 : index
    %c0_7 = arith.constant 0 : index
    %c0_8 = arith.constant 0 : index
    %22 = vector.load %arg4[%c0_6, %c0_7, %c0_8] : memref<1x8x128xf32, #tpu.memory_space<vmem>>, vector<1x8x128xf32>
    %23 = vector.shape_cast %21 : vector<8x8xf32> to vector<1x8x8xf32>
    %cst_9 = arith.constant dense<0.000000e+00> : vector<1xf32>
    %24 = vector.multi_reduction <add>, %23, %cst_9 [1, 2] : vector<1x8x8xf32> to vector<1xf32>
    %25 = vector.shape_cast %24 : vector<1xf32> to vector<1x1x1xf32>
    %26 = vector.extract %25[0, 0, 0] : f32 from vector<1x1x1xf32>
    %27 = vector.broadcast %26 : f32 to vector<1x8x128xf32>
    %28 = arith.addf %22, %27 : vector<1x8x128xf32>
    %c0_10 = arith.constant 0 : index
    %c0_11 = arith.constant 0 : index
    %c0_12 = arith.constant 0 : index
    %29 = vector.load %arg4[%c0_10, %c0_11, %c0_12] : memref<1x8x128xf32, #tpu.memory_space<vmem>>, vector<1x8x128xf32>
    tpu.vector_store %arg4[%c0_10, %c0_11, %c0_12], %28 {strides = array<i32>} : memref<1x8x128xf32, #tpu.memory_space<vmem>>, vector<1x8x128xf32>,
    return
  }
  func.func @transform_0(%arg0: i32, %arg1: i32) -> (i32, i32) {
    %c1_i32 = arith.constant 1 : i32
    %0 = arith.muli %arg0, %c1_i32 : i32
    %1 = arith.addi %0, %arg1 : i32
    %c0_i32 = arith.constant 0 : i32
    %c0_i32_0 = arith.constant 0 : i32
    return %1, %c0_i32 : i32, i32
  }
  func.func @transform_1(%arg0: i32, %arg1: i32) -> (i32, i32) {
    %c1_i32 = arith.constant 1 : i32
    %0 = arith.muli %arg0, %c1_i32 : i32
    %1 = arith.addi %0, %arg1 : i32
    %c0_i32 = arith.constant 0 : i32
    %c0_i32_0 = arith.constant 0 : i32
    return %1, %c0_i32 : i32, i32
  }
  func.func @transform_2(%arg0: i32, %arg1: i32) -> (i32, i32, i32) {
    %c0_i32 = arith.constant 0 : i32
    %c0_i32_0 = arith.constant 0 : i32
    %c0_i32_1 = arith.constant 0 : i32
    return %arg0, %c0_i32, %c0_i32_0 : i32, i32, i32
  }
}

</mosaic_0001>

<llo_original>
// kernel: tpu_custom_call.1
$region0: #{tpu_custom_call.1}
  #allocation0 [shape = 'u32[]', space=smem, size = 0x4, offset = 0x4, fixed_abs, tag = 'smem constant byte address 0x4 - core index']
  #allocation1 [shape = 'u32[72,128]{1,0:T(1,128)}', space=vmem, size = 0x9000, scoped, tag = 'internal scratch']
  %s0 = inlined_call_operand.vmem [shape: f32[8,1], index: 0, kind: input, shape index: {}]
  %s1 = inlined_call_operand.vmem [shape: f32[8,8], index: 1, kind: input, shape index: {}]
  %s2 = inlined_call_operand.hbm [shape: f32[1,8,128], index: 2, kind: output, shape index: {}]
  %s3 = sld [smem:[#allocation0]]
  $region22: #{tpu_custom_call.1} parent=0
    _
  %s5 = ssub.s32 1, %s3
  %s6 = scalar_select 0, %s5, %s3
  $region1: #{tpu_custom_call.1} parent=0
    #allocation2 [shape = 'u8[4096]{0}', space=vmem, size = 0x1000, scoped, tag = 'output window, operand 0, single buffered']
    #allocation3 [shape = 's32[1]{0}', space=sflag, size = 0x4, scoped, tag = 'scoped memory for tpu_custom_call.1']
    %7 = vsyncpa [#allocation3], 0
    // Predicated region
    $region2: #{tpu_custom_call.1} parent=1 // pred_check
      _
    $region3: #{tpu_custom_call.1} parent=1 // pred_check_branch
      %9 = sbr.rel (0) target = $region5
    $region4: #{tpu_custom_call.1} parent=1 // pred_region
      %s10 = sadd.s32 0, 0
      %p11 = scmp.lt.s32.totalorder %s10, 0
      %s12 = scalar_select %p11, %s10, 0
      %s13 = smul.addr %s12, 8
      %s14 = scalar_lea.vmem %s0, %s13
      %s15 = sadd.s32 0, 0
    $region5: #{tpu_custom_call.1} parent=1 // pred_fallthru
      _
    // Predicated region
    $region6: #{tpu_custom_call.1} parent=1 // pred_check
      _
    $region7: #{tpu_custom_call.1} parent=1 // pred_check_branch
      %17 = sbr.rel (0) target = $region9
    $region8: #{tpu_custom_call.1} parent=1 // pred_region
      %s18 = sadd.s32 0, 0
      %p19 = scmp.lt.s32.totalorder %s18, 0
      %s20 = scalar_select %p19, %s18, 0
      %s21 = smul.addr %s20, 8
      %s22 = scalar_lea.vmem %s1, %s21
      %s23 = sadd.s32 0, 0
    $region9: #{tpu_custom_call.1} parent=1 // pred_fallthru
      _
    %s24 = sadd.s32 0, 0
    %p25 = scmp.lt.s32.totalorder %s24, 0
    %s26 = scalar_select %p25, %s24, 0
    %s27 = smul.addr %s26, 8
    %s28 = scalar_lea.vmem %s0, %s27
    %s29 = sadd.s32 0, 0
    %p30 = scmp.lt.s32.totalorder %s29, 0
    %s31 = scalar_select %p30, %s29, 0
    %s32 = smul.addr %s31, 8
    %s33 = scalar_lea.vmem %s1, %s32
    %s34 = sadd.s32 0, 0
    %p35 = scmp.lt.s32.totalorder %s34, 0
    %s36 = scalar_select %p35, %s34, 0
    %s37 = smul.addr %s36, 8
    %s38 = scalar_lea.vmem %s0, %s37
    %s39 = sadd.s32 0, 0
    %s40 = sadd.s32 0, 0
    %p41 = scmp.lt.s32.totalorder %s40, 0
    %s42 = scalar_select %p41, %s40, 0
    %s43 = smul.addr %s42, 8
    %s44 = scalar_lea.vmem %s1, %s43
    %s45 = sadd.s32 0, 0
    %p46 = scmp.eq.s32.totalorder 0, 0
    // Predicated region
    $region10: #{tpu_custom_call.1} parent=1 // pred_check
      %p47 = pneg %p46
    $region11: #{tpu_custom_call.1} parent=1 // pred_check_branch
      %49 = sbr.rel (%p47) target = $region13
    $region12: #{tpu_custom_call.1} parent=1 // pred_region
      %50 = vst [vmem:[#allocation2] sm:$0xff] 0.0
    $region13: #{tpu_custom_call.1} parent=1 // pred_fallthru
      _
    %v51 = vld [vmem:[%s38] sm:$0xff]
    %v52 = vld [vmem:[%s44] sm:$0xff]
    %54 = vset.pattern.permute.xlu0 0
    %55 = vperm.xlu0 %54, %v51
    %v56 = vpop.permute.xlu0 %55
    %v58 = vsub.f32 %v52, %v56
    %v59 = vadd.f32 %v58, 0.1
    %v60 = vmax.f32 %v59, 0.0
    %s61 = sadd.s32 0, 0
    %s62 = smul.u32 %s61, 8
    %v63 = vlaneseq
    %v64 = vshrl.u32 %v63, 7
    %v65 = vstv %s62
    %v66 = vadd.s32 %v65, %v64
    %vm67 = vcmp.lt.s32.totalorder %v66, 2
    %v68 = vsel %vm67, %v60, 0.0
    %v69 = vld [vmem:[#allocation2] sm:$0xff]
    %vm70 = vcmask 64512
    %v71 = vsel %vm70, %v68, 0.0
    %72 = vadd.xlane.f32.xlu0 %v71
    %v73 = vpop.xlane.xlu0 %72
    %v74 = vrot.slane %v73, 4
    %v75 = vadd.f32 %v73, %v74
    %v76 = vrot.slane %v75, 2
    %v77 = vadd.f32 %v75, %v76
    %v78 = vrot.slane %v77, 1
    %v79 = vadd.f32 %v77, %v78
    %s80 = vtos %v79
    %v81 = vstv %s80
    %v82 = vadd.f32 %v69, %v81
    %83 = vst [vmem:[#allocation2] sm:$0xff] %v82
    // Predicated region
    $region14: #{tpu_custom_call.1} parent=1 // pred_check
      _
    $region15: #{tpu_custom_call.1} parent=1 // pred_check_branch
      %85 = sbr.rel (0) target = $region17
    $region16: #{tpu_custom_call.1} parent=1 // pred_region
      %87 = vsyncadd [#allocation3], 0
      %s89 = sshll.u32 [#allocation2], 4
      %s90 = int_to_ptr.vmem [resolvable:$true] %s89
      %s91 = sshll.u32 %s2, 4
      %s92 = int_to_ptr.hbm [resolvable:$true] %s91
      %94 = dma.vmem_to_hbm [thread:$0]  %s90, 128, %s92, [#allocation3]
    $region17: #{tpu_custom_call.1} parent=1 // pred_fallthru
      _
    // Predicated region
    $region18: #{tpu_custom_call.1} parent=1 // pred_check
      _
    $region19: #{tpu_custom_call.1} parent=1 // pred_check_branch
      %96 = sbr.rel (0) target = $region21
    $region20: #{tpu_custom_call.1} parent=1 // pred_region
      %98 = dma.done [#allocation3], 128
    $region21: #{tpu_custom_call.1} parent=1 // pred_fallthru
      _
    %99 = vsyncpa [#allocation3], 1

</llo_original>
